<compile_context>
chip_gen: v7x
topology: tpu7x:2x2x1
jax: 0.10.0
libtpu: 0.0.40
codegen_flags: <defaults>
</compile_context>

<pallas_src>
import functools
import math

import jax
import jax.numpy as jnp
import numpy as np
from jax.experimental import pallas as pl
from jax.experimental.pallas import tpu as pltpu

_VMEM_LIMIT = 48 * 1024 * 1024        # requested scoped VMEM limit (< v7x 64 MiB physical)
_TILE_VMEM_BUDGET = 32 * 1024 * 1024  # budget used to size the M tile (double-buffered)
_MAX_TILE_ROWS = 4096                 # cap on wide rows per grid step
_MIN_GRID_STEPS = 4                   # keep pipelining + v7x 2-TC split for big problems


def _round_up(x, m):
    return (x + m - 1) // m * m


def _pick_fold(E, M):
    """Smallest f with (f*E) % 128 == 0 (lane-dense output); capped so the
    block-diagonal weight / extra MXU flops stay negligible."""
    f = 128 // math.gcd(E, 128)
    if f > 8 or M % f != 0:
        return 1
    return f


def _pick_tile_m(Mw, Kw, Ew, itemsize, sublane):
    """Largest sublane-multiple wide-row tile whose lane-padded, double-buffered
    footprint (x tile + out tile + resident weight) fits the VMEM budget."""
    kp = _round_up(Kw, 128)                       # x tile lane padding
    ep = _round_up(Ew, 128)                       # out tile lane padding (== Ew when folded)
    weight_bytes = 2 * _round_up(Kw, sublane) * ep * itemsize   # resident, count 2 bufs anyway
    per_row = 2 * (kp + ep) * itemsize            # double-buffered x row + out row
    cap = (_TILE_VMEM_BUDGET - weight_bytes) // per_row
    cap = max(sublane, min(int(cap), _MAX_TILE_ROWS))
    # Guard: for large problems keep >= _MIN_GRID_STEPS grid steps (pipelining,
    # >= 2 steps per TensorCore on v7x) -- only when tiles stay comfortably big.
    if Mw >= _MIN_GRID_STEPS * 1024:
        cap = min(cap, _round_up(-(-Mw // _MIN_GRID_STEPS), sublane))
    cap = min(cap, _round_up(Mw, sublane))        # never bigger than (rounded) problem
    return int(_round_up(max(cap, sublane), sublane))


def _patch_embed_kernel(x_ref, w_ref, b_ref, o_ref):
    # x_ref: (TMw, f*K) folded patch rows; w_ref: (f*K, f*E) block-diag W^T;
    # b_ref: (1, f*E) tiled bias (f32); o_ref: (TMw, f*E) lane-dense output.
    acc = jnp.dot(x_ref[...], w_ref[...], preferred_element_type=jnp.float32)
    o_ref[...] = (acc + b_ref[...]).astype(o_ref.dtype)


def patch_embed_forward(x, weight, bias, patch_size, *, compute_dtype=None):
    """Pallas PatchEmbed forward.

    Args:
      x:      (B, C, H, W)  NCHW image.
      weight: (E, C, p, p)  Conv2d weight (PyTorch layout).
      bias:   (E,)          Conv2d bias.
      patch_size: int p (kernel == stride).
      compute_dtype: optional streaming dtype for the GEMM operands
        (e.g. jnp.bfloat16 on HBM-bound v5e); accumulation stays f32.

    Returns:
      (out, Hp, Wp) where out is (B, Hp*Wp, E).
    """
    B, C, H, W = x.shape
    E = weight.shape[0]
    p = patch_size
    assert H % p == 0 and W % p == 0, "spatial dims must be divisible by patch size"
    Hp, Wp = H // p, W // p
    Np = Hp * Wp
    K = C * p * p
    M = B * Np

    out_dtype = x.dtype
    cdt = jnp.dtype(compute_dtype) if compute_dtype is not None else jnp.dtype(x.dtype)

    # ---- glue: extract non-overlapping patches, features ordered (c, kh, kw) ----
    # (B, C, Hp, p, Wp, p) -> (B, Hp, Wp, C, p, p) -> (M, K).  One extra HBM pass;
    # see TODO(synk) above about fusing this into the kernel.
    xp = x.reshape(B, C, Hp, p, Wp, p)
    xp = jnp.transpose(xp, (0, 2, 4, 1, 3, 5)).reshape(M, K)

    # ---- lane-dense folding: f original rows -> 1 wide row of f*E lanes ----
    f = _pick_fold(E, M)
    Mw, Kw, Ew = M // f, f * K, f * E

    xw = xp.reshape(Mw, Kw).astype(cdt)                       # free reshape
    w_t = jnp.transpose(weight.reshape(E, K)).astype(cdt)     # (K, E), one-time transpose
    w_wide = jnp.kron(jnp.eye(f, dtype=cdt), w_t)             # (f*K, f*E) block-diagonal
    b_wide = jnp.tile(bias.astype(jnp.float32), f).reshape(1, Ew)

    sublane = {4: 8, 2: 16, 1: 32}.get(cdt.itemsize, 8)
    tmw = _pick_tile_m(Mw, Kw, Ew, cdt.itemsize, sublane)
    grid = (pl.cdiv(Mw, tmw),)

    out_wide = pl.pallas_call(
        _patch_embed_kernel,
        out_shape=jax.ShapeDtypeStruct((Mw, Ew), out_dtype),
        grid_spec=pltpu.PrefetchScalarGridSpec(
            num_scalar_prefetch=0,
            grid=grid,
            in_specs=[
                pl.BlockSpec((tmw, Kw), lambda i: (i, 0)),    # streamed folded patch rows
                pl.BlockSpec((Kw, Ew), lambda i: (0, 0)),     # VMEM-resident block-diag weight
                pl.BlockSpec((1, Ew), lambda i: (0, 0)),      # VMEM-resident tiled bias
            ],
            out_specs=pl.BlockSpec((tmw, Ew), lambda i: (i, 0)),
        ),
        compiler_params=pltpu.CompilerParams(
            dimension_semantics=("parallel",),   # independent rows -> megacore split on v7x
            vmem_limit_bytes=_VMEM_LIMIT,
        ),
    )(xw, w_wide, b_wide)

    out = out_wide.reshape(M, E).reshape(B, Np, E)             # free reshapes
    return out, Hp, Wp


def _reference_forward(x, weight, bias, patch_size):
    """Plain-JAX reference (PyTorch Conv2d(stride=kernel) + flatten(2).transpose(1,2))."""
    B, C, H, W = x.shape
    E = weight.shape[0]
    p = patch_size
    Hp, Wp = H // p, W // p
    xp = x.reshape(B, C, Hp, p, Wp, p)
    xp = jnp.transpose(xp, (0, 2, 4, 1, 3, 5)).reshape(B, Hp * Wp, C * p * p)
    w_mat = weight.reshape(E, C * p * p)
    return jnp.einsum("bnk,ek->bne", xp, w_mat) + bias[None, None, :], Hp, Wp


if __name__ == "__main__":
    # Small shapes consistent with the module:
    #   patch_size=4, in_c=4, embed_dim=32, input (B=2, C=4, H=16, W=16)
    patch_size = 4
    in_c = 4
    embed_dim = 32
    B, H, W = 2, 16, 16

    key = jax.random.PRNGKey(0)
    kx, kw, kb = jax.random.split(key, 3)
    x = jax.random.normal(kx, (B, in_c, H, W), dtype=jnp.float32)
    weight = 0.02 * jax.random.normal(kw, (embed_dim, in_c, patch_size, patch_size),
                                      dtype=jnp.float32)
    bias = 0.01 * jax.random.normal(kb, (embed_dim,), dtype=jnp.float32)

    ref, Hp_ref, Wp_ref = _reference_forward(x, weight, bias, patch_size)

    # f32 path (exact).
    fwd = jax.jit(functools.partial(patch_embed_forward, patch_size=patch_size))
    out, Hp, Wp = fwd(x, weight, bias)
    out = jax.block_until_ready(out)
    assert (Hp, Wp) == (Hp_ref, Wp_ref) == (H // patch_size, W // patch_size)
    assert out.shape == (B, Hp * Wp, embed_dim)
    np.testing.assert_allclose(np.asarray(out), np.asarray(ref), rtol=1e-5, atol=1e-5)

    # bf16-streaming path (v5e-style bandwidth saver), loose tolerance.
    fwd_bf16 = jax.jit(functools.partial(patch_embed_forward, patch_size=patch_size,
                                         compute_dtype=jnp.bfloat16))
    out16, _, _ = fwd_bf16(x, weight, bias)
    out16 = jax.block_until_ready(out16)
    np.testing.assert_allclose(np.asarray(out16), np.asarray(ref), rtol=2e-2, atol=2e-2)

    print("KERNEL_OK")
</pallas_src>

<mosaic_0001>
module attributes {stable_mosaic.version = 11 : i64} {
  func.func @_patch_embed_kernel(%arg0: i32, %arg1: memref<8x256xf32, #tpu.memory_space<vmem>>, %arg2: memref<256x128xf32, #tpu.memory_space<vmem>>, %arg3: memref<1x128xf32, #tpu.memory_space<vmem>>, %arg4: memref<8x128xf32, #tpu.memory_space<vmem>>) attributes {dimension_semantics = [#tpu.dimension_semantics<parallel>], iteration_bounds = array<i64: 1>, scalar_prefetch = 0 : i64, scratch_operands = 0 : i64, tpu.core_type = #tpu.core_type<tc>, window_params = [{transform_indices = @transform_0, window_bounds = array<i64: 8, 256>}, {pipeline_mode = #tpu.pipeline_mode<synchronous>, transform_indices = @transform_1, window_bounds = array<i64: 256, 128>}, {pipeline_mode = #tpu.pipeline_mode<synchronous>, transform_indices = @transform_2, window_bounds = array<i64: 1, 128>}, {transform_indices = @transform_3, window_bounds = array<i64: 8, 128>}]} {
    %c0 = arith.constant 0 : index
    %c0_0 = arith.constant 0 : index
    %0 = vector.load %arg1[%c0, %c0_0] : memref<8x256xf32, #tpu.memory_space<vmem>>, vector<8x256xf32>
    %c0_1 = arith.constant 0 : index
    %c0_2 = arith.constant 0 : index
    %1 = vector.load %arg2[%c0_1, %c0_2] : memref<256x128xf32, #tpu.memory_space<vmem>>, vector<256x128xf32>
    %cst = arith.constant dense<0.000000e+00> : vector<8x128xf32>
    %2 = tpu.matmul %0, %1, %cst {dimension_numbers = #tpu.dot_dimension_numbers<[1], [0], [0], [1], [0, 0, 1, 1], [], []>} : vector<8x256xf32>, vector<256x128xf32>, vector<8x128xf32> -> vector<8x128xf32>
    %c0_3 = arith.constant 0 : index
    %c0_4 = arith.constant 0 : index
    %3 = vector.load %arg3[%c0_3, %c0_4] : memref<1x128xf32, #tpu.memory_space<vmem>>, vector<1x128xf32>
    %4 = vector.broadcast %3 : vector<1x128xf32> to vector<8x128xf32>
    %5 = arith.addf %2, %4 : vector<8x128xf32>
    %c0_5 = arith.constant 0 : index
    %c0_6 = arith.constant 0 : index
    %6 = vector.load %arg4[%c0_5, %c0_6] : memref<8x128xf32, #tpu.memory_space<vmem>>, vector<8x128xf32>
    tpu.vector_store %arg4[%c0_5, %c0_6], %5 {strides = array<i32>} : memref<8x128xf32, #tpu.memory_space<vmem>>, vector<8x128xf32>,
    return
  }
  func.func @transform_0(%arg0: i32) -> (i32, i32) {
    %c0_i32 = arith.constant 0 : i32
    %c0_i32_0 = arith.constant 0 : i32
    return %arg0, %c0_i32 : i32, i32
  }
  func.func @transform_1(%arg0: i32) -> (i32, i32) {
    %c0_i32 = arith.constant 0 : i32
    %c0_i32_0 = arith.constant 0 : i32
    %c0_i32_1 = arith.constant 0 : i32
    return %c0_i32, %c0_i32_0 : i32, i32
  }
  func.func @transform_2(%arg0: i32) -> (i32, i32) {
    %c0_i32 = arith.constant 0 : i32
    %c0_i32_0 = arith.constant 0 : i32
    %c0_i32_1 = arith.constant 0 : i32
    return %c0_i32, %c0_i32_0 : i32, i32
  }
  func.func @transform_3(%arg0: i32) -> (i32, i32) {
    %c0_i32 = arith.constant 0 : i32
    %c0_i32_0 = arith.constant 0 : i32
    return %arg0, %c0_i32 : i32, i32
  }
}

</mosaic_0001>

<llo_original>
// kernel: tile.8
$region0: #{tile.8}
  #allocation0 [shape = 's32[1]{0}', space=sflag, size = 0x4, scoped, tag = 'scoped memory for tile.8']
  %s0 = inlined_call_operand.vmem [shape: f32[32], index: 0, kind: input, shape index: {}]
  %s1 = inlined_call_operand.vmem [shape: f32[4,32], index: 1, kind: output, shape index: {}]
  // Predicated region
  $region2: #{tile.8} parent=0 // pred_check
    _
  $region3: #{tile.8} parent=0 // pred_check_branch
    %3 = sbr.rel (0) target = $region5
  $region4: #{tile.8} parent=0 // pred_region
    _
  $region5: #{tile.8} parent=0 // pred_fallthru
    _
  %v4 = vld [vmem:[%s0] ss:$0 sm:$0xff]
  %5 = vst [vmem:[%s1] sm:$0xf] %v4

// kernel: tile.9
$region0: #{tile.9}
  %s0 = inlined_call_operand.vmem [shape: f32[4,32], index: 0, kind: input, shape index: {}]
  %s1 = inlined_call_operand.vmem [shape: f32[1,128], index: 1, kind: output, shape index: {}]
  $region1: #{tile.9} parent=0
    #allocation0 [shape = 'u8[4096]{0}', space=vmem, size = 0x1000, scoped, tag = 'scoped mem for output reshape']
    #allocation1 [shape = 'u8[4096]{0}', space=vmem, size = 0x1000, scoped, tag = 'scoped mem for input reshape']
    %s3 = sshllo.u32 0, 4
    %v4 = vld [vmem:[%s0] sm:%s3]
    %5 = vst [vmem:[#allocation1] sm:%s3] %v4
    %v6 = vld [vmem:[#allocation1] sm:$0x1]
    %vm7 = vcmask 261120
    %8 = vst.msk [vmem:[#allocation0] sm:$0x1] %vm7, %v6
    %s9 = scalar_lea.vmem [#allocation1], 3
    %v10 = vld [vmem:[%s9] sm:$0x1]
    %11 = vrot.lane.b32.xlu0 %v10, 96
    %v12 = vpop.permute.xlu0 %11
    %vm13 = vcmask 1048320
    %14 = vst.msk [vmem:[#allocation0] sm:$0x1] %vm13, %v12
    %s15 = scalar_lea.vmem [#allocation1], 2
    %v16 = vld [vmem:[%s15] sm:$0x1]
    %17 = vrot.lane.b32.xlu0 %v16, 64
    %v18 = vpop.permute.xlu0 %17
    %vm19 = vcmask 785920
    %20 = vst.msk [vmem:[#allocation0] sm:$0x1] %vm19, %v18
    %s21 = scalar_lea.vmem [#allocation1], 1
    %v22 = vld [vmem:[%s21] sm:$0x1]
    %23 = vrot.lane.b32.xlu0 %v22, 32
    %v24 = vpop.permute.xlu0 %23
    %vm25 = vcmask 523520
    %26 = vst.msk [vmem:[#allocation0] sm:$0x1] %vm25, %v24
    %s28 = sshllo.u32 0, 1
    %v30 = vld [vmem:[#allocation0] sm:%s28]
    %s31 = sshllo.u32 0, 1
    %32 = vst [vmem:[%s1] sm:%s31] %v30

// kernel: patch_embed_forward.1
$region0: #{patch_embed_forward.1}
  #allocation0 [shape = 'u32[]', space=smem, size = 0x4, offset = 0x4, fixed_abs, tag = 'smem constant byte address 0x4 - core index']
  #allocation1 [shape = 'u32[144,128]{1,0:T(1,128)}', space=vmem, size = 0x12000, scoped, tag = 'internal scratch']
  %s0 = inlined_call_operand.vmem [shape: f32[8,256], index: 0, kind: input, shape index: {}]
  %s1 = inlined_call_operand.vmem [shape: f32[256,128], index: 1, kind: input, shape index: {}]
  %s2 = inlined_call_operand.vmem [shape: f32[1,128], index: 2, kind: input, shape index: {}]
  %s3 = inlined_call_operand.vmem [shape: f32[8,128], index: 3, kind: output, shape index: {}]
  %s4 = sld [smem:[#allocation0]]
  $region22: #{patch_embed_forward.1} parent=0
    _
  %s6 = ssub.s32 1, %s4
  %s7 = scalar_select 0, %s6, %s4
  // Predicated region
  $region2: #{patch_embed_forward.1} parent=0 // pred_check
    _
  $region3: #{patch_embed_forward.1} parent=0 // pred_check_branch
    %9 = sbr.rel (0) target = $region5
  $region4: #{patch_embed_forward.1} parent=0 // pred_region
    _
  $region5: #{patch_embed_forward.1} parent=0 // pred_fallthru
    _
  // Predicated region
  $region6: #{patch_embed_forward.1} parent=0 // pred_check
    _
  $region7: #{patch_embed_forward.1} parent=0 // pred_check_branch
    %11 = sbr.rel (0) target = $region9
  $region8: #{patch_embed_forward.1} parent=0 // pred_region
    _
  $region9: #{patch_embed_forward.1} parent=0 // pred_fallthru
    _
  // Predicated region
  $region10: #{patch_embed_forward.1} parent=0 // pred_check
    _
  $region11: #{patch_embed_forward.1} parent=0 // pred_check_branch
    %13 = sbr.rel (0) target = $region13
  $region12: #{patch_embed_forward.1} parent=0 // pred_region
    _
  $region13: #{patch_embed_forward.1} parent=0 // pred_fallthru
    _
  %v14 = vld [vmem:[%s0] sm:$0xff]
  %v15 = vld [vmem:[%s0 + $0x8] sm:$0xff]
  %v16 = vld [vmem:[%s1] sm:$0xff]
  %v17 = vld [vmem:[%s1 + $0x8] sm:$0xff]
  %v18 = vld [vmem:[%s1 + $0x10] sm:$0xff]
  %v19 = vld [vmem:[%s1 + $0x18] sm:$0xff]
  %v20 = vld [vmem:[%s1 + $0x20] sm:$0xff]
  %v21 = vld [vmem:[%s1 + $0x28] sm:$0xff]
  %v22 = vld [vmem:[%s1 + $0x30] sm:$0xff]
  %v23 = vld [vmem:[%s1 + $0x38] sm:$0xff]
  %v24 = vld [vmem:[%s1 + $0x40] sm:$0xff]
  %v25 = vld [vmem:[%s1 + $0x48] sm:$0xff]
  %v26 = vld [vmem:[%s1 + $0x50] sm:$0xff]
  %v27 = vld [vmem:[%s1 + $0x58] sm:$0xff]
  %v28 = vld [vmem:[%s1 + $0x60] sm:$0xff]
  %v29 = vld [vmem:[%s1 + $0x68] sm:$0xff]
  %v30 = vld [vmem:[%s1 + $0x70] sm:$0xff]
  %v31 = vld [vmem:[%s1 + $0x78] sm:$0xff]
  %v32 = vld [vmem:[%s1 + $0x80] sm:$0xff]
  %v33 = vld [vmem:[%s1 + $0x88] sm:$0xff]
  %v34 = vld [vmem:[%s1 + $0x90] sm:$0xff]
  %v35 = vld [vmem:[%s1 + $0x98] sm:$0xff]
  %v36 = vld [vmem:[%s1 + $0xa0] sm:$0xff]
  %v37 = vld [vmem:[%s1 + $0xa8] sm:$0xff]
  %v38 = vld [vmem:[%s1 + $0xb0] sm:$0xff]
  %v39 = vld [vmem:[%s1 + $0xb8] sm:$0xff]
  %v40 = vld [vmem:[%s1 + $0xc0] sm:$0xff]
  %v41 = vld [vmem:[%s1 + $0xc8] sm:$0xff]
  %v42 = vld [vmem:[%s1 + $0xd0] sm:$0xff]
  %v43 = vld [vmem:[%s1 + $0xd8] sm:$0xff]
  %v44 = vld [vmem:[%s1 + $0xe0] sm:$0xff]
  %v45 = vld [vmem:[%s1 + $0xe8] sm:$0xff]
  %v46 = vld [vmem:[%s1 + $0xf0] sm:$0xff]
  %v47 = vld [vmem:[%s1 + $0xf8] sm:$0xff]
  %v48 = vld [vmem:[%s2] sm:$0x1]
  %v50 = vlaneseq
  %v51 = vshrl.u32 %v50, 7
  %v52 = vsub.s32 0, %v51
  %v53 = vrot.slane %v48, %v52
  %55 = vmatprep.subr.mxu0 0.0
  %56 = vmatpush1.msra.mxu0 %v16
  %57 = vmatprep.subr.mxu0 0.0
  %58 = vmatpush1.msra.mxu0 %v17
  %59 = vmatprep.subr.mxu0 0.0
  %60 = vmatpush1.msra.mxu0 %v18
  %61 = vmatprep.subr.mxu0 0.0
  %62 = vmatpush1.msra.mxu0 %v19
  %63 = vmatprep.subr.mxu0 0.0
  %64 = vmatpush1.msra.mxu0 %v20
  %65 = vmatprep.subr.mxu0 0.0
  %66 = vmatpush1.msra.mxu0 %v21
  %67 = vmatprep.subr.mxu0 0.0
  %68 = vmatpush1.msra.mxu0 %v22
  %69 = vmatprep.subr.mxu0 0.0
  %70 = vmatpush1.msra.mxu0 %v23
  %71 = vmatprep.subr.mxu0 0.0
  %72 = vmatpush1.msra.mxu0 %v24
  %73 = vmatprep.subr.mxu0 0.0
  %74 = vmatpush1.msra.mxu0 %v25
  %75 = vmatprep.subr.mxu0 0.0
  %76 = vmatpush1.msra.mxu0 %v26
  %77 = vmatprep.subr.mxu0 0.0
  %78 = vmatpush1.msra.mxu0 %v27
  %79 = vmatprep.subr.mxu0 0.0
  %80 = vmatpush1.msra.mxu0 %v28
  %81 = vmatprep.subr.mxu0 0.0
  %82 = vmatpush1.msra.mxu0 %v29
  %83 = vmatprep.subr.mxu0 0.0
  %84 = vmatpush1.msra.mxu0 %v30
  %85 = vmatprep.subr.mxu0 0.0
  %86 = vmatpush1.msra.mxu0 %v31
  %87 = vmatprep.subr.mxu0 0.0
  %88 = vmatpush1.msra.mxu0 %v32
  %89 = vmatprep.subr.mxu0 0.0
  %90 = vmatpush1.msra.mxu0 %v33
  %91 = vmatprep.subr.mxu0 0.0
  %92 = vmatpush1.msra.mxu0 %v34
  %93 = vmatprep.subr.mxu0 0.0
  %94 = vmatpush1.msra.mxu0 %v35
  %95 = vmatprep.subr.mxu0 0.0
  %96 = vmatpush1.msra.mxu0 %v36
  %97 = vmatprep.subr.mxu0 0.0
  %98 = vmatpush1.msra.mxu0 %v37
  %99 = vmatprep.subr.mxu0 0.0
  %100 = vmatpush1.msra.mxu0 %v38
  %101 = vmatprep.subr.mxu0 0.0
  %102 = vmatpush1.msra.mxu0 %v39
  %103 = vmatprep.subr.mxu0 0.0
  %104 = vmatpush1.msra.mxu0 %v40
  %105 = vmatprep.subr.mxu0 0.0
  %106 = vmatpush1.msra.mxu0 %v41
  %107 = vmatprep.subr.mxu0 0.0
  %108 = vmatpush1.msra.mxu0 %v42
  %109 = vmatprep.subr.mxu0 0.0
  %110 = vmatpush1.msra.mxu0 %v43
  %111 = vmatprep.subr.mxu0 0.0
  %112 = vmatpush1.msra.mxu0 %v44
  %113 = vmatprep.subr.mxu0 0.0
  %114 = vmatpush1.msra.mxu0 %v45
  %115 = vmatprep.subr.mxu0 0.0
  %116 = vmatpush1.msra.mxu0 %v46
  %117 = vmatprep.subr.mxu0 0.0
  %118 = vmatpush1.msra.mxu0 %v47
  %119 = vmatprep.mubr.f32.mxu0 %v15
  %120 = vmatmul.mubr.f32.gmra.mrb[0].mxu0 %v14
  %v121 = vpop.f32.mrb[0].mxu0
  %v122 = vadd.f32 %v53, %v121
  %v123 = vpop.f32.mrb[0].mxu0
  %124 = vdwg.mxu0
  %125 = vst [vmem:[%s3] sm:$0xff] %v122
  // Predicated region
  $region14: #{patch_embed_forward.1} parent=0 // pred_check
    _
  $region15: #{patch_embed_forward.1} parent=0 // pred_check_branch
    %127 = sbr.rel (0) target = $region17
  $region16: #{patch_embed_forward.1} parent=0 // pred_region
    _
  $region17: #{patch_embed_forward.1} parent=0 // pred_fallthru
    _
  // Predicated region
  $region18: #{patch_embed_forward.1} parent=0 // pred_check
    _
  $region19: #{patch_embed_forward.1} parent=0 // pred_check_branch
    %129 = sbr.rel (0) target = $region21
  $region20: #{patch_embed_forward.1} parent=0 // pred_region
    _
  $region21: #{patch_embed_forward.1} parent=0 // pred_fallthru
    _

</llo_original>
